<compile_context>
chip_gen: v7x
topology: tpu7x:2x2x1
jax: 0.10.0
libtpu: 0.0.40
codegen_flags: <defaults>
</compile_context>

<pallas_src>
import functools

import jax
import jax.numpy as jnp
from jax import lax
from jax.experimental import pallas as pl
from jax.experimental.pallas import tpu as pltpu

HIDDEN = 128
SUB_ROWS = 256                      # in-kernel sub-chunk (bounds vreg pressure)
_TB_CANDIDATES = (1024, 512, 256, 128, 64, 32, 16, 8)


def _round_up(x, m):
    return ((x + m - 1) // m) * m


def _chip_config():
    """Per-generation VMEM budget / cap and multi-TensorCore flag."""
    kind = ""
    try:
        kind = jax.devices()[0].device_kind.lower()
    except Exception:
        pass
    if "v7" in kind:                       # 64 MiB VMEM, 2 TCs/chip
        return {"vmem_budget": 24 << 20, "vmem_cap": 44 << 20, "multi_core": True}
    if "v5" in kind or "v6" in kind:       # 128 MiB VMEM, 1 TC/chip
        return {"vmem_budget": 56 << 20, "vmem_cap": 100 << 20, "multi_core": False}
    if "v4" in kind:                       # 128 MiB VMEM, megacore
        return {"vmem_budget": 48 << 20, "vmem_cap": 96 << 20, "multi_core": True}
    # Unknown chip: be conservative (v7x-safe).
    return {"vmem_budget": 24 << 20, "vmem_cap": 44 << 20, "multi_core": True}


def _vmem_estimate_bytes(tb, in_dim, x_bytes, w_bytes):
    # Pallas double-buffers every BlockSpec'd operand by default -- including the
    # "resident" weight/bias blocks -- so count 2 copies of everything.
    return 2 * (tb * in_dim * x_bytes          # x tile
                + tb * HIDDEN * 4              # out tile (f32)
                + in_dim * HIDDEN * w_bytes    # w1
                + HIDDEN * HIDDEN * w_bytes    # w2
                + 2 * HIDDEN * 4)              # b1, b2 (f32)


def _pick_tile(B, in_dim, tb_request, x_bytes, w_bytes, vmem_budget, multi_core):
    if tb_request is not None:
        target = max(8, min(int(tb_request), _TB_CANDIDATES[0]))
    else:
        target = min(_TB_CANDIDATES[0], _round_up(max(B, 1), 8))
        if multi_core and B >= 32:
            # Keep >= 2 grid steps so the "parallel" batch axis can be sharded
            # across both TensorCores (v4 / v7x).
            target = min(target, _round_up(pl.cdiv(B, 2), 8))
    tb = next(c for c in _TB_CANDIDATES if c <= target)
    # Shrink until the (double-buffer-aware) VMEM estimate fits the budget.
    while tb > 8 and _vmem_estimate_bytes(tb, in_dim, x_bytes, w_bytes) > vmem_budget:
        tb //= 2
    return tb


def _sub_chunk(tb):
    if tb <= SUB_ROWS:
        return tb, 1
    return SUB_ROWS, tb // SUB_ROWS     # tb is a power of two >= 512 -> divisible


def _mlp_kernel(x_ref, w1_ref, b1_ref, w2_ref, b2_ref, out_ref, *,
                sub_rows, n_sub, matmul_dtype):
    # Biases hoisted out of the sub-chunk loop; kept f32 (v5e VPU-safe epilogue).
    b1 = b1_ref[...]
    b2 = b2_ref[...]

    def compute(off):
        xc = x_ref[pl.ds(off, sub_rows), :].astype(matmul_dtype)
        # fc1 + bias + ReLU (f32 MXU accumulation, f32 epilogue)
        h1 = jnp.dot(xc, w1_ref[...], preferred_element_type=jnp.float32)
        h1 = jnp.maximum(h1 + b1, 0.0)
        # fc2 + bias + ReLU
        h2 = jnp.dot(h1.astype(matmul_dtype), w2_ref[...],
                     preferred_element_type=jnp.float32)
        h2 = jnp.maximum(h2 + b2, 0.0)
        out_ref[pl.ds(off, sub_rows), :] = h2.astype(out_ref.dtype)

    if n_sub == 1:
        compute(0)
    else:
        # Real loop (not unrolled) bounds live ranges to one sub-chunk of vregs;
        # loop overhead is negligible next to two 256-row matmuls.
        def body(c, carry):
            compute(pl.multiple_of(c * sub_rows, sub_rows))
            return carry
        lax.fori_loop(0, n_sub, body, 0)


def mlp_forward(x, w1, b1, w2, b2, *, tb=None, matmul_dtype=jnp.bfloat16):
    """x: [B, in_dim]; w1: [in_dim, 128]; b1: [128]; w2: [128, 128]; b2: [128].

    matmul_dtype: jnp.bfloat16 (default, MXU-native on all generations, f32
    accumulation + f32 epilogue) or jnp.float32 / None for the exact path.
    """
    B, in_dim = x.shape
    mm_dtype = jnp.dtype(jnp.float32 if matmul_dtype is None else matmul_dtype)

    cfg = _chip_config()
    x_bytes = jnp.dtype(x.dtype).itemsize
    w_bytes = mm_dtype.itemsize
    tb = _pick_tile(B, in_dim, tb, x_bytes, w_bytes,
                    cfg["vmem_budget"], cfg["multi_core"])
    sub_rows, n_sub = _sub_chunk(tb)
    n_steps = pl.cdiv(B, tb)    # ragged last block handled by Pallas (no padding)

    # Cast weights ONCE outside the kernel (not per grid step); biases stay f32.
    if jnp.dtype(w1.dtype) != mm_dtype:
        w1 = w1.astype(mm_dtype)
    if jnp.dtype(w2.dtype) != mm_dtype:
        w2 = w2.astype(mm_dtype)
    b1_2d = b1.reshape(1, HIDDEN).astype(jnp.float32)
    b2_2d = b2.reshape(1, HIDDEN).astype(jnp.float32)

    flops = 2 * B * (in_dim + HIDDEN) * HIDDEN
    bytes_accessed = (B * in_dim * x_bytes          # x
                      + in_dim * HIDDEN * w_bytes   # w1
                      + HIDDEN * HIDDEN * w_bytes   # w2
                      + 2 * HIDDEN * 4              # biases
                      + B * HIDDEN * 4)             # out
    cost = pl.CostEstimate(flops=flops, transcendentals=0,
                           bytes_accessed=bytes_accessed)

    est = _vmem_estimate_bytes(tb, in_dim, x_bytes, w_bytes)
    vmem_limit = int(min(cfg["vmem_cap"], max(16 << 20, (est * 3) // 2)))

    kernel = functools.partial(_mlp_kernel, sub_rows=sub_rows, n_sub=n_sub,
                               matmul_dtype=mm_dtype)

    return pl.pallas_call(
        kernel,
        out_shape=jax.ShapeDtypeStruct((B, HIDDEN), jnp.float32),
        grid_spec=pltpu.PrefetchScalarGridSpec(
            num_scalar_prefetch=0,
            grid=(n_steps,),
            in_specs=[
                pl.BlockSpec((tb, in_dim), lambda i: (i, 0)),      # x tile (pipelined)
                pl.BlockSpec((in_dim, HIDDEN), lambda i: (0, 0)),  # w1 (resident)
                pl.BlockSpec((1, HIDDEN), lambda i: (0, 0)),       # b1
                pl.BlockSpec((HIDDEN, HIDDEN), lambda i: (0, 0)),  # w2 (resident)
                pl.BlockSpec((1, HIDDEN), lambda i: (0, 0)),       # b2
            ],
            out_specs=pl.BlockSpec((tb, HIDDEN), lambda i: (i, 0)),
        ),
        compiler_params=pltpu.CompilerParams(
            dimension_semantics=("parallel",),   # megacore-shardable batch axis
            vmem_limit_bytes=vmem_limit,
        ),
        cost_estimate=cost,
    )(x, w1, b1_2d, w2, b2_2d)


def init_params(key, in_dim):
    # Deterministic init mimicking PyTorch nn.Linear default:
    # U(-1/sqrt(fan_in), 1/sqrt(fan_in)) for weight and bias.
    k1, k2, k3, k4 = jax.random.split(key, 4)
    bound1 = 1.0 / jnp.sqrt(in_dim)
    bound2 = 1.0 / jnp.sqrt(HIDDEN)
    # Stored pre-transposed: [in, out] so the kernel computes x @ W.
    w1 = jax.random.uniform(k1, (in_dim, HIDDEN), jnp.float32, -bound1, bound1)
    b1 = jax.random.uniform(k2, (HIDDEN,), jnp.float32, -bound1, bound1)
    w2 = jax.random.uniform(k3, (HIDDEN, HIDDEN), jnp.float32, -bound2, bound2)
    b2 = jax.random.uniform(k4, (HIDDEN,), jnp.float32, -bound2, bound2)
    return w1, b1, w2, b2


def _ref_mlp(x, w1, b1, w2, b2):
    h = jnp.maximum(x @ w1 + b1, 0.0)
    return jnp.maximum(h @ w2 + b2, 0.0)


if __name__ == "__main__":
    key = jax.random.PRNGKey(0)
    kx, kp, kx2 = jax.random.split(key, 3)

    # --- Small-shape check (module's nominal forward): B=8, in_dim=32 ---
    B, in_dim = 8, 32
    x = jax.random.normal(kx, (B, in_dim), jnp.float32)
    w1, b1, w2, b2 = init_params(kp, in_dim)
    ref = _ref_mlp(x, w1, b1, w2, b2)

    # Exact f32 matmul path.
    out_f32 = jax.block_until_ready(
        mlp_forward(x, w1, b1, w2, b2, matmul_dtype=jnp.float32))
    assert out_f32.shape == (B, HIDDEN)
    assert jnp.allclose(out_f32, ref, atol=1e-5, rtol=1e-5)

    # Default bf16-operand path (f32 accumulation), looser tolerance.
    out_bf16 = jax.block_until_ready(mlp_forward(x, w1, b1, w2, b2))
    assert jnp.allclose(out_bf16, ref, atol=5e-2, rtol=5e-2)

    # --- Larger, ragged batch: multi-step grid + ragged last block (no pad/slice) ---
    B2, in_dim2 = 1000, 64
    x2 = jax.random.normal(kx2, (B2, in_dim2), jnp.float32)
    w1b, b1b, w2b, b2b = init_params(jax.random.PRNGKey(1), in_dim2)
    ref2 = _ref_mlp(x2, w1b, b1b, w2b, b2b)

    out2 = jax.block_until_ready(mlp_forward(x2, w1b, b1b, w2b, b2b))
    assert out2.shape == (B2, HIDDEN)
    assert jnp.allclose(out2, ref2, atol=5e-2, rtol=5e-2)

    out2_f32 = jax.block_until_ready(
        mlp_forward(x2, w1b, b1b, w2b, b2b, matmul_dtype=jnp.float32))
    assert jnp.allclose(out2_f32, ref2, atol=1e-4, rtol=1e-4)

    print("KERNEL_OK")
</pallas_src>

<mosaic_0001>
module attributes {stable_mosaic.version = 11 : i64} {
  func.func @_mlp_kernel(%arg0: i32, %arg1: memref<8x32xf32, #tpu.memory_space<vmem>>, %arg2: memref<32x128xf32, #tpu.memory_space<vmem>>, %arg3: memref<1x128xf32, #tpu.memory_space<vmem>>, %arg4: memref<128x128xf32, #tpu.memory_space<vmem>>, %arg5: memref<1x128xf32, #tpu.memory_space<vmem>>, %arg6: memref<8x128xf32, #tpu.memory_space<vmem>>) attributes {dimension_semantics = [#tpu.dimension_semantics<parallel>], iteration_bounds = array<i64: 1>, scalar_prefetch = 0 : i64, scratch_operands = 0 : i64, tpu.core_type = #tpu.core_type<tc>, window_params = [{transform_indices = @transform_0, window_bounds = array<i64: 8, 32>}, {pipeline_mode = #tpu.pipeline_mode<synchronous>, transform_indices = @transform_1, window_bounds = array<i64: 32, 128>}, {pipeline_mode = #tpu.pipeline_mode<synchronous>, transform_indices = @transform_2, window_bounds = array<i64: 1, 128>}, {pipeline_mode = #tpu.pipeline_mode<synchronous>, transform_indices = @transform_3, window_bounds = array<i64: 128, 128>}, {pipeline_mode = #tpu.pipeline_mode<synchronous>, transform_indices = @transform_4, window_bounds = array<i64: 1, 128>}, {transform_indices = @transform_5, window_bounds = array<i64: 8, 128>}]} {
    %c0 = arith.constant 0 : index
    %c0_0 = arith.constant 0 : index
    %0 = vector.load %arg3[%c0, %c0_0] : memref<1x128xf32, #tpu.memory_space<vmem>>, vector<1x128xf32>
    %c0_1 = arith.constant 0 : index
    %c0_2 = arith.constant 0 : index
    %1 = vector.load %arg5[%c0_1, %c0_2] : memref<1x128xf32, #tpu.memory_space<vmem>>, vector<1x128xf32>
    %c0_3 = arith.constant 0 : index
    %c0_4 = arith.constant 0 : index
    %2 = vector.load %arg1[%c0_3, %c0_4] : memref<8x32xf32, #tpu.memory_space<vmem>>, vector<8x32xf32>
    %c0_5 = arith.constant 0 : index
    %c0_6 = arith.constant 0 : index
    %3 = vector.load %arg2[%c0_5, %c0_6] : memref<32x128xf32, #tpu.memory_space<vmem>>, vector<32x128xf32>
    %cst = arith.constant dense<0.000000e+00> : vector<8x128xf32>
    %4 = tpu.matmul %2, %3, %cst {dimension_numbers = #tpu.dot_dimension_numbers<[1], [0], [0], [1], [0, 0, 1, 1], [], []>} : vector<8x32xf32>, vector<32x128xf32>, vector<8x128xf32> -> vector<8x128xf32>
    %5 = vector.broadcast %0 : vector<1x128xf32> to vector<8x128xf32>
    %6 = arith.addf %4, %5 : vector<8x128xf32>
    %cst_7 = arith.constant 0.000000e+00 : f32
    %7 = vector.broadcast %cst_7 : f32 to vector<8x128xf32>
    %8 = arith.maximumf %6, %7 : vector<8x128xf32>
    %c0_8 = arith.constant 0 : index
    %c0_9 = arith.constant 0 : index
    %9 = vector.load %arg4[%c0_8, %c0_9] : memref<128x128xf32, #tpu.memory_space<vmem>>, vector<128x128xf32>
    %cst_10 = arith.constant dense<0.000000e+00> : vector<8x128xf32>
    %10 = tpu.matmul %8, %9, %cst_10 {dimension_numbers = #tpu.dot_dimension_numbers<[1], [0], [0], [1], [0, 0, 1, 1], [], []>} : vector<8x128xf32>, vector<128x128xf32>, vector<8x128xf32> -> vector<8x128xf32>
    %11 = vector.broadcast %1 : vector<1x128xf32> to vector<8x128xf32>
    %12 = arith.addf %10, %11 : vector<8x128xf32>
    %cst_11 = arith.constant 0.000000e+00 : f32
    %13 = vector.broadcast %cst_11 : f32 to vector<8x128xf32>
    %14 = arith.maximumf %12, %13 : vector<8x128xf32>
    %c0_12 = arith.constant 0 : index
    %c0_13 = arith.constant 0 : index
    %15 = vector.load %arg6[%c0_12, %c0_13] : memref<8x128xf32, #tpu.memory_space<vmem>>, vector<8x128xf32>
    tpu.vector_store %arg6[%c0_12, %c0_13], %14 {strides = array<i32>} : memref<8x128xf32, #tpu.memory_space<vmem>>, vector<8x128xf32>,
    return
  }
  func.func @transform_0(%arg0: i32) -> (i32, i32) {
    %c0_i32 = arith.constant 0 : i32
    %c0_i32_0 = arith.constant 0 : i32
    return %arg0, %c0_i32 : i32, i32
  }
  func.func @transform_1(%arg0: i32) -> (i32, i32) {
    %c0_i32 = arith.constant 0 : i32
    %c0_i32_0 = arith.constant 0 : i32
    %c0_i32_1 = arith.constant 0 : i32
    return %c0_i32, %c0_i32_0 : i32, i32
  }
  func.func @transform_2(%arg0: i32) -> (i32, i32) {
    %c0_i32 = arith.constant 0 : i32
    %c0_i32_0 = arith.constant 0 : i32
    %c0_i32_1 = arith.constant 0 : i32
    return %c0_i32, %c0_i32_0 : i32, i32
  }
  func.func @transform_3(%arg0: i32) -> (i32, i32) {
    %c0_i32 = arith.constant 0 : i32
    %c0_i32_0 = arith.constant 0 : i32
    %c0_i32_1 = arith.constant 0 : i32
    return %c0_i32, %c0_i32_0 : i32, i32
  }
  func.func @transform_4(%arg0: i32) -> (i32, i32) {
    %c0_i32 = arith.constant 0 : i32
    %c0_i32_0 = arith.constant 0 : i32
    %c0_i32_1 = arith.constant 0 : i32
    return %c0_i32, %c0_i32_0 : i32, i32
  }
  func.func @transform_5(%arg0: i32) -> (i32, i32) {
    %c0_i32 = arith.constant 0 : i32
    %c0_i32_0 = arith.constant 0 : i32
    return %arg0, %c0_i32 : i32, i32
  }
}

</mosaic_0001>

<llo_original>
// kernel: tpu_custom_call.1
$region0: #{tpu_custom_call.1}
  #allocation0 [shape = 'u32[]', space=smem, size = 0x4, offset = 0x4, fixed_abs, tag = 'smem constant byte address 0x4 - core index']
  #allocation1 [shape = 'u32[144,128]{1,0:T(1,128)}', space=vmem, size = 0x12000, scoped, tag = 'internal scratch']
  %s0 = inlined_call_operand.hbm [shape: f32[8,32], index: 0, kind: input, shape index: {}]
  %s1 = inlined_call_operand.hbm [shape: f32[32,128], index: 1, kind: input, shape index: {}]
  %s2 = inlined_call_operand.vmem [shape: f32[1,128], index: 2, kind: input, shape index: {}]
  %s3 = inlined_call_operand.hbm [shape: f32[128,128], index: 3, kind: input, shape index: {}]
  %s4 = inlined_call_operand.vmem [shape: f32[1,128], index: 4, kind: input, shape index: {}]
  %s5 = inlined_call_operand.hbm [shape: f32[8,128], index: 5, kind: output, shape index: {}]
  %s6 = sld [smem:[#allocation0]]
  $region42: #{tpu_custom_call.1} parent=0
    _
  %s8 = ssub.s32 1, %s6
  %s9 = scalar_select 0, %s8, %s6
  $region1: #{tpu_custom_call.1} parent=0
    #allocation2 [shape = 'u8[4096]{0}', space=vmem, size = 0x1000, scoped, tag = 'input window, operand 0, single buffered']
    #allocation3 [shape = 's32[1]{0}', space=sflag, size = 0x4, scoped, tag = 'scoped memory for tpu_custom_call.1']
    #allocation4 [shape = 's32[1]{0}', space=sflag, size = 0x4, scoped, tag = 'scoped memory for tpu_custom_call.1']
    #allocation5 [shape = 'u8[16384]{0}', space=vmem, size = 0x4000, scoped, tag = 'input window, operand 1, single buffered']
    #allocation6 [shape = 's32[1]{0}', space=sflag, size = 0x4, scoped, tag = 'scoped memory for tpu_custom_call.1']
    #allocation7 [shape = 'u8[65536]{0}', space=vmem, size = 0x10000, scoped, tag = 'input window, operand 3, single buffered']
    #allocation8 [shape = 'u8[4096]{0}', space=vmem, size = 0x1000, scoped, tag = 'output window, operand 0, single buffered']
    %10 = vsyncpa [#allocation3], 0
    %11 = vsyncpa [#allocation6], 0
    %12 = vsyncpa [#allocation4], 0
    // Predicated region
    $region2: #{tpu_custom_call.1} parent=1 // pred_check
      _
    $region3: #{tpu_custom_call.1} parent=1 // pred_check_branch
      %14 = sbr.rel (0) target = $region5
    $region4: #{tpu_custom_call.1} parent=1 // pred_region
      %s16 = ssub.s32 128, 128
      %17 = vsyncadd [#allocation3], %s16
      %s19 = sshll.u32 [#allocation2], 4
      %s20 = int_to_ptr.vmem [resolvable:$true] %s19
      %22 = dma.hbm_to_vmem [thread:$0]  %s0, 128, %s20, [#allocation3]
    $region5: #{tpu_custom_call.1} parent=1 // pred_fallthru
      _
    // Predicated region
    $region6: #{tpu_custom_call.1} parent=1 // pred_check
      _
    $region7: #{tpu_custom_call.1} parent=1 // pred_check_branch
      %24 = sbr.rel (0) target = $region9
    $region8: #{tpu_custom_call.1} parent=1 // pred_region
      %s26 = ssub.s32 512, 512
      %27 = vsyncadd [#allocation6], %s26
      %s28 = sshll.u32 [#allocation5], 4
      %s29 = int_to_ptr.vmem [resolvable:$true] %s28
      %34 = dma.hbm_to_vmem [thread:$0]  %s1, 512, %s29, [#allocation6], 128, 128, 8
    $region9: #{tpu_custom_call.1} parent=1 // pred_fallthru
      _
    // Predicated region
    $region10: #{tpu_custom_call.1} parent=1 // pred_check
      _
    $region11: #{tpu_custom_call.1} parent=1 // pred_check_branch
      %36 = sbr.rel (0) target = $region13
    $region12: #{tpu_custom_call.1} parent=1 // pred_region
      _
    $region13: #{tpu_custom_call.1} parent=1 // pred_fallthru
      _
    // Predicated region
    $region14: #{tpu_custom_call.1} parent=1 // pred_check
      _
    $region15: #{tpu_custom_call.1} parent=1 // pred_check_branch
      %38 = sbr.rel (0) target = $region17
    $region16: #{tpu_custom_call.1} parent=1 // pred_region
      %s40 = ssub.s32 2048, 2048
      %41 = vsyncadd [#allocation6], %s40
      %s42 = sshll.u32 [#allocation7], 4
      %s43 = int_to_ptr.vmem [resolvable:$true] %s42
      %48 = dma.hbm_to_vmem [thread:$0]  %s3, 2048, %s43, [#allocation6], 128, 128, 8
    $region17: #{tpu_custom_call.1} parent=1 // pred_fallthru
      _
    // Predicated region
    $region18: #{tpu_custom_call.1} parent=1 // pred_check
      _
    $region19: #{tpu_custom_call.1} parent=1 // pred_check_branch
      %50 = sbr.rel (0) target = $region21
    $region20: #{tpu_custom_call.1} parent=1 // pred_region
      _
    $region21: #{tpu_custom_call.1} parent=1 // pred_fallthru
      _
    // Predicated region
    $region22: #{tpu_custom_call.1} parent=1 // pred_check
      _
    $region23: #{tpu_custom_call.1} parent=1 // pred_check_branch
      %52 = sbr.rel (0) target = $region25
    $region24: #{tpu_custom_call.1} parent=1 // pred_region
      %53 = dma.done [#allocation3], 128
    $region25: #{tpu_custom_call.1} parent=1 // pred_fallthru
      _
    // Predicated region
    $region26: #{tpu_custom_call.1} parent=1 // pred_check
      _
    $region27: #{tpu_custom_call.1} parent=1 // pred_check_branch
      %55 = sbr.rel (0) target = $region29
    $region28: #{tpu_custom_call.1} parent=1 // pred_region
      %56 = dma.done [#allocation6], 512
    $region29: #{tpu_custom_call.1} parent=1 // pred_fallthru
      _
    // Predicated region
    $region30: #{tpu_custom_call.1} parent=1 // pred_check
      _
    $region31: #{tpu_custom_call.1} parent=1 // pred_check_branch
      %58 = sbr.rel (0) target = $region33
    $region32: #{tpu_custom_call.1} parent=1 // pred_region
      %59 = dma.done [#allocation6], 2048
    $region33: #{tpu_custom_call.1} parent=1 // pred_fallthru
      _
    %v60 = vld [vmem:[%s2] sm:$0x1]
    %v61 = vld [vmem:[%s4] sm:$0x1]
    %v62 = vld [vmem:[#allocation2] sm:$0xff]
    %v63 = vld [vmem:[#allocation5] sm:$0xff]
    %v64 = vld [vmem:[#allocation5 + $0x8] sm:$0xff]
    %v65 = vld [vmem:[#allocation5 + $0x10] sm:$0xff]
    %v66 = vld [vmem:[#allocation5 + $0x18] sm:$0xff]
    %v68 = vlaneseq
    %v69 = vshrl.u32 %v68, 7
    %v70 = vsub.s32 0, %v69
    %v71 = vrot.slane %v60, %v70
    %vm73 = vcmask 261120
    %v75 = vsel %vm73, %v62, 0
    %77 = vmatprep.subr.mxu0 0.0
    %78 = vmatpush1.msra.mxu0 %v63
    %79 = vmatprep.subr.mxu0 0.0
    %80 = vmatpush1.msra.mxu0 %v64
    %81 = vmatprep.subr.mxu0 0.0
    %82 = vmatpush1.msra.mxu0 %v65
    %83 = vmatprep.subr.mxu0 0.0
    %84 = vmatpush1.msra.mxu0 %v66
    %85 = vmatprep.subr.mxu0 0.0
    %86 = vmatpush1.msra.mxu0 0.0
    %87 = vmatprep.subr.mxu0 0.0
    %88 = vmatpush1.msra.mxu0 0.0
    %89 = vmatprep.subr.mxu0 0.0
    %90 = vmatpush1.msra.mxu0 0.0
    %91 = vmatprep.subr.mxu0 0.0
    %92 = vmatpush1.msra.mxu0 0.0
    %93 = vmatprep.subr.mxu0 0.0
    %94 = vmatpush1.msra.mxu0 0.0
    %95 = vmatprep.subr.mxu0 0.0
    %96 = vmatpush1.msra.mxu0 0.0
    %97 = vmatprep.subr.mxu0 0.0
    %98 = vmatpush1.msra.mxu0 0.0
    %99 = vmatprep.subr.mxu0 0.0
    %100 = vmatpush1.msra.mxu0 0.0
    %101 = vmatprep.subr.mxu0 0.0
    %102 = vmatpush1.msra.mxu0 0.0
    %103 = vmatprep.subr.mxu0 0.0
    %104 = vmatpush1.msra.mxu0 0.0
    %105 = vmatprep.subr.mxu0 0.0
    %106 = vmatpush1.msra.mxu0 0.0
    %107 = vmatprep.subr.mxu0 0.0
    %108 = vmatpush1.msra.mxu0 0.0
    %109 = vmatprep.subr.mxu0 0.0
    %110 = vmatpush1.msra.mxu0 0.0
    %111 = vmatprep.subr.mxu0 0.0
    %112 = vmatpush1.msra.mxu0 0.0
    %113 = vmatprep.subr.mxu0 0.0
    %114 = vmatpush1.msra.mxu0 0.0
    %115 = vmatprep.subr.mxu0 0.0
    %116 = vmatpush1.msra.mxu0 0.0
    %117 = vmatprep.subr.mxu0 0.0
    %118 = vmatpush1.msra.mxu0 0.0
    %119 = vmatprep.subr.mxu0 0.0
    %120 = vmatpush1.msra.mxu0 0.0
    %121 = vmatprep.subr.mxu0 0.0
    %122 = vmatpush1.msra.mxu0 0.0
    %123 = vmatprep.subr.mxu0 0.0
    %124 = vmatpush1.msra.mxu0 0.0
    %125 = vmatprep.subr.mxu0 0.0
    %126 = vmatpush1.msra.mxu0 0.0
    %127 = vmatprep.subr.mxu0 0.0
    %128 = vmatpush1.msra.mxu0 0.0
    %129 = vmatprep.subr.mxu0 0.0
    %130 = vmatpush1.msra.mxu0 0.0
    %131 = vmatprep.subr.mxu0 0.0
    %132 = vmatpush1.msra.mxu0 0.0
    %133 = vmatprep.subr.mxu0 0.0
    %134 = vmatpush1.msra.mxu0 0.0
    %135 = vmatprep.subr.mxu0 0.0
    %136 = vmatpush1.msra.mxu0 0.0
    %137 = vmatprep.subr.mxu0 0.0
    %138 = vmatpush1.msra.mxu0 0.0
    %139 = vmatprep.subr.mxu0 0.0
    %140 = vmatpush1.msra.mxu0 0.0
    %141 = vmatprep.mubr.f32.mxu0 0.0
    %142 = vmatmul.mubr.f32.gmra.mrb[0].mxu0 %v75
    %v143 = vpop.f32.mrb[0].mxu0
    %v144 = vadd.f32 %v71, %v143
    %v145 = vpop.f32.mrb[0].mxu0
    %146 = vdwg.mxu0
    %v147 = vmax.f32 %v144, 0.0
    %v148 = vld [vmem:[#allocation7] sm:$0xff]
    %v149 = vld [vmem:[#allocation7 + $0x8] sm:$0xff]
    %v150 = vld [vmem:[#allocation7 + $0x10] sm:$0xff]
    %v151 = vld [vmem:[#allocation7 + $0x18] sm:$0xff]
    %v152 = vld [vmem:[#allocation7 + $0x20] sm:$0xff]
    %v153 = vld [vmem:[#allocation7 + $0x28] sm:$0xff]
    %v154 = vld [vmem:[#allocation7 + $0x30] sm:$0xff]
    %v155 = vld [vmem:[#allocation7 + $0x38] sm:$0xff]
    %v156 = vld [vmem:[#allocation7 + $0x40] sm:$0xff]
    %v157 = vld [vmem:[#allocation7 + $0x48] sm:$0xff]
    %v158 = vld [vmem:[#allocation7 + $0x50] sm:$0xff]
    %v159 = vld [vmem:[#allocation7 + $0x58] sm:$0xff]
    %v160 = vld [vmem:[#allocation7 + $0x60] sm:$0xff]
    %v161 = vld [vmem:[#allocation7 + $0x68] sm:$0xff]
    %v162 = vld [vmem:[#allocation7 + $0x70] sm:$0xff]
    %v163 = vld [vmem:[#allocation7 + $0x78] sm:$0xff]
    %v165 = vlaneseq
    %v166 = vshrl.u32 %v165, 7
    %v167 = vsub.s32 0, %v166
    %v168 = vrot.slane %v61, %v167
    %170 = vmatprep.subr.mxu0 0.0
    %171 = vmatpush1.msra.mxu0 %v148
    %172 = vmatprep.subr.mxu0 0.0
    %173 = vmatpush1.msra.mxu0 %v149
    %174 = vmatprep.subr.mxu0 0.0
    %175 = vmatpush1.msra.mxu0 %v150
    %176 = vmatprep.subr.mxu0 0.0
    %177 = vmatpush1.msra.mxu0 %v151
    %178 = vmatprep.subr.mxu0 0.0
    %179 = vmatpush1.msra.mxu0 %v152
    %180 = vmatprep.subr.mxu0 0.0
    %181 = vmatpush1.msra.mxu0 %v153
    %182 = vmatprep.subr.mxu0 0.0
    %183 = vmatpush1.msra.mxu0 %v154
    %184 = vmatprep.subr.mxu0 0.0
    %185 = vmatpush1.msra.mxu0 %v155
    %186 = vmatprep.subr.mxu0 0.0
    %187 = vmatpush1.msra.mxu0 %v156
    %188 = vmatprep.subr.mxu0 0.0
    %189 = vmatpush1.msra.mxu0 %v157
    %190 = vmatprep.subr.mxu0 0.0
    %191 = vmatpush1.msra.mxu0 %v158
    %192 = vmatprep.subr.mxu0 0.0
    %193 = vmatpush1.msra.mxu0 %v159
    %194 = vmatprep.subr.mxu0 0.0
    %195 = vmatpush1.msra.mxu0 %v160
    %196 = vmatprep.subr.mxu0 0.0
    %197 = vmatpush1.msra.mxu0 %v161
    %198 = vmatprep.subr.mxu0 0.0
    %199 = vmatpush1.msra.mxu0 %v162
    %200 = vmatprep.subr.mxu0 0.0
    %201 = vmatpush1.msra.mxu0 %v163
    %202 = vmatprep.subr.mxu0 0.0
    %203 = vmatpush1.msra.mxu0 0.0
    %204 = vmatprep.subr.mxu0 0.0
    %205 = vmatpush1.msra.mxu0 0.0
    %206 = vmatprep.subr.mxu0 0.0
    %207 = vmatpush1.msra.mxu0 0.0
    %208 = vmatprep.subr.mxu0 0.0
    %209 = vmatpush1.msra.mxu0 0.0
    %210 = vmatprep.subr.mxu0 0.0
    %211 = vmatpush1.msra.mxu0 0.0
    %212 = vmatprep.subr.mxu0 0.0
    %213 = vmatpush1.msra.mxu0 0.0
    %214 = vmatprep.subr.mxu0 0.0
    %215 = vmatpush1.msra.mxu0 0.0
    %216 = vmatprep.subr.mxu0 0.0
    %217 = vmatpush1.msra.mxu0 0.0
    %218 = vmatprep.subr.mxu0 0.0
    %219 = vmatpush1.msra.mxu0 0.0
    %220 = vmatprep.subr.mxu0 0.0
    %221 = vmatpush1.msra.mxu0 0.0
    %222 = vmatprep.subr.mxu0 0.0
    %223 = vmatpush1.msra.mxu0 0.0
    %224 = vmatprep.subr.mxu0 0.0
    %225 = vmatpush1.msra.mxu0 0.0
    %226 = vmatprep.subr.mxu0 0.0
    %227 = vmatpush1.msra.mxu0 0.0
    %228 = vmatprep.subr.mxu0 0.0
    %229 = vmatpush1.msra.mxu0 0.0
    %230 = vmatprep.subr.mxu0 0.0
    %231 = vmatpush1.msra.mxu0 0.0
    %232 = vmatprep.subr.mxu0 0.0
    %233 = vmatpush1.msra.mxu0 0.0
    %234 = vmatprep.mubr.f32.mxu0 0.0
    %235 = vmatmul.mubr.f32.gmra.mrb[0].mxu0 %v147
    %v236 = vpop.f32.mrb[0].mxu0
    %v237 = vadd.f32 %v168, %v236
    %v238 = vpop.f32.mrb[0].mxu0
    %239 = vdwg.mxu0
    %v240 = vmax.f32 %v237, 0.0
    %241 = vst [vmem:[#allocation8] sm:$0xff] %v240
    // Predicated region
    $region34: #{tpu_custom_call.1} parent=1 // pred_check
      _
    $region35: #{tpu_custom_call.1} parent=1 // pred_check_branch
      %243 = sbr.rel (0) target = $region37
    $region36: #{tpu_custom_call.1} parent=1 // pred_region
      %s245 = ssub.s32 128, 128
      %246 = vsyncadd [#allocation4], %s245
      %s248 = sshll.u32 [#allocation8], 4
      %s249 = int_to_ptr.vmem [resolvable:$true] %s248
      %251 = dma.vmem_to_hbm [thread:$0]  %s249, 128, %s5, [#allocation4]
    $region37: #{tpu_custom_call.1} parent=1 // pred_fallthru
      _
    // Predicated region
    $region38: #{tpu_custom_call.1} parent=1 // pred_check
      _
    $region39: #{tpu_custom_call.1} parent=1 // pred_check_branch
      %253 = sbr.rel (0) target = $region41
    $region40: #{tpu_custom_call.1} parent=1 // pred_region
      %254 = dma.done [#allocation4], 128
    $region41: #{tpu_custom_call.1} parent=1 // pred_fallthru
      _
    %255 = vsyncpa [#allocation3], 1
    %256 = vsyncpa [#allocation6], 1
    %257 = vsyncpa [#allocation4], 1

</llo_original>
